<compile_context>
chip_gen: v6e
topology: v6e:2x2x1
jax: 0.10.0
libtpu: 0.0.40
codegen_flags: <defaults>
</compile_context>

<pallas_src>
import math

import jax
import jax.numpy as jnp
from jax.experimental import pallas as pl
from jax.experimental.pallas import tpu as pltpu

EPS = 1e-6  # LayerNormalization eps


def _layernorm_kernel(alpha_ref, bias_ref, x_ref, o_ref):
    # x_ref: (TM, H) tile in VMEM; alpha_ref/bias_ref: (1,) scalars in SMEM.
    x = x_ref[...]
    xf = x.astype(jnp.float32)
    h = xf.shape[-1]

    # Single-pass reduction: one sweep over the tile gives both moments.
    s1 = jnp.sum(xf, axis=-1, keepdims=True)          # (TM, 1)
    s2 = jnp.sum(xf * xf, axis=-1, keepdims=True)     # (TM, 1)
    mean = s1 * jnp.float32(1.0 / h)
    # torch.std(dim=-1) is the unbiased estimator: divide by (H - 1).
    var = (s2 - s1 * mean) / jnp.float32(h - 1)
    var = jnp.maximum(var, 0.0)                       # guard tiny negatives
    std = jnp.sqrt(var)

    # One reciprocal per row (EUP path), then broadcast multiply over lanes.
    inv = pl.reciprocal(std + jnp.float32(EPS), approx=False)
    scale = alpha_ref[0] * inv                        # (TM, 1)
    y = scale * (xf - mean) + bias_ref[0]
    o_ref[...] = y.astype(o_ref.dtype)


def _choose_row_tile(rows_pad, h, itemsize):
    """Pick a row-tile size: ~2 MiB per input block, multiple of 8 sublanes."""
    target_bytes = 2 * 1024 * 1024
    tm = max(8, (target_bytes // max(1, h * itemsize)) // 8 * 8)
    tm = min(tm, 1024)
    if tm >= rows_pad:
        tm = rows_pad
    return tm


def _layernorm_pallas(x, alpha, bias):
    orig_shape = x.shape
    h = orig_shape[-1]
    rows = math.prod(orig_shape[:-1])
    x2 = x.reshape(rows, h)

    itemsize = jnp.dtype(x.dtype).itemsize
    rows_pad = ((rows + 7) // 8) * 8                  # sublane-align the row axis
    tm = _choose_row_tile(rows_pad, h, itemsize)
    rows_pad = ((rows_pad + tm - 1) // tm) * tm       # multiple of the tile
    if rows_pad != rows:
        # Padded zero rows are harmless (std=0 -> bias) and sliced off below.
        x2 = jnp.pad(x2, ((0, rows_pad - rows), (0, 0)))

    # NOTE: block last dim == full H, so the (8,128) constraint is satisfied
    # even when H (e.g. 32 here) is not a multiple of 128.  For production
    # models H is typically a multiple of 128 and stores are lane-dense.
    grid = (rows_pad // tm,)
    out = pl.pallas_call(
        _layernorm_kernel,
        out_shape=jax.ShapeDtypeStruct((rows_pad, h), x.dtype),
        grid_spec=pltpu.PrefetchScalarGridSpec(
            num_scalar_prefetch=0,
            grid=grid,
            in_specs=[
                pl.BlockSpec(memory_space=pltpu.MemorySpace.SMEM),  # alpha (1,)
                pl.BlockSpec(memory_space=pltpu.MemorySpace.SMEM),  # bias  (1,)
                pl.BlockSpec((tm, h), lambda i: (i, 0)),
            ],
            out_specs=pl.BlockSpec((tm, h), lambda i: (i, 0)),
        ),
        compiler_params=pltpu.CompilerParams(
            dimension_semantics=("parallel",),
        ),
    )(alpha, bias, x2)

    if rows_pad != rows:
        out = out[:rows]
    return out.reshape(orig_shape)


def decoder_forward(x, encoder_output, src_mask, tgt_mask, alpha, bias, layers=()):
    """Mirrors Decoder.forward: run injected layers, then LayerNormalization.

    `layers` is the opaque nn.ModuleList dependency of the PyTorch module; it
    is applied here as plain-JAX glue (each element is a callable
    layer(x, encoder_output, src_mask, tgt_mask) -> x).
    """
    # TODO(synk): the decoder layers themselves are injected dependencies with
    # no definition in the source module; they are applied as plain callables.
    for layer in layers:
        x = layer(x, encoder_output, src_mask, tgt_mask)
    return _layernorm_pallas(x, alpha, bias)


def _reference_layernorm(x, alpha, bias):
    x = x.astype(jnp.float32)
    mean = jnp.mean(x, axis=-1, keepdims=True)
    diff = x - mean
    var = jnp.sum(diff * diff, axis=-1, keepdims=True) / (x.shape[-1] - 1)
    std = jnp.sqrt(var)
    return alpha[0] * diff / (std + EPS) + bias[0]


if __name__ == "__main__":
    key = jax.random.PRNGKey(0)
    kx, ke = jax.random.split(key)

    B, S, H = 2, 8, 32
    x = jax.random.normal(kx, (B, S, H), dtype=jnp.float32)
    encoder_output = jax.random.normal(ke, (B, S, H), dtype=jnp.float32)
    src_mask = jnp.ones((B, 1, 1, S), dtype=jnp.float32)
    tgt_mask = jnp.ones((B, 1, S, S), dtype=jnp.float32)

    # Deterministic parameter init, matching LayerNormalization.__init__:
    alpha = jnp.ones((1,), dtype=jnp.float32)   # nn.Parameter(torch.ones(1))
    bias = jnp.zeros((1,), dtype=jnp.float32)   # nn.Parameter(torch.zeros(1))

    ref = _reference_layernorm(x, alpha, bias)

    out = decoder_forward(x, encoder_output, src_mask, tgt_mask, alpha, bias,
                          layers=())
    out = jax.block_until_ready(out)

    assert out.shape == (B, S, H)
    assert jnp.allclose(out, ref, atol=1e-5, rtol=1e-5)

    print("KERNEL_OK")
</pallas_src>

<mosaic_0001>
module attributes {stable_mosaic.version = 11 : i64} {
  func.func @_layernorm_kernel(%arg0: i32, %arg1: memref<1xf32, #tpu.memory_space<smem>>, %arg2: memref<1xf32, #tpu.memory_space<smem>>, %arg3: memref<16x32xf32, #tpu.memory_space<vmem>>, %arg4: memref<16x32xf32, #tpu.memory_space<vmem>>) attributes {dimension_semantics = [#tpu.dimension_semantics<parallel>], iteration_bounds = array<i64: 1>, scalar_prefetch = 0 : i64, scratch_operands = 0 : i64, tpu.core_type = #tpu.core_type<tc>, window_params = [{transform_indices = @transform_0, window_bounds = array<i64: 1>}, {transform_indices = @transform_1, window_bounds = array<i64: 1>}, {transform_indices = @transform_2, window_bounds = array<i64: 16, 32>}, {transform_indices = @transform_3, window_bounds = array<i64: 16, 32>}]} {
    %c0 = arith.constant 0 : index
    %c0_0 = arith.constant 0 : index
    %0 = vector.load %arg3[%c0, %c0_0] : memref<16x32xf32, #tpu.memory_space<vmem>>, vector<16x32xf32>
    %cst = arith.constant dense<0.000000e+00> : vector<16xf32>
    %1 = vector.multi_reduction <add>, %0, %cst [1] : vector<16x32xf32> to vector<16xf32>
    %2 = vector.shape_cast %1 : vector<16xf32> to vector<16x1xf32>
    %3 = arith.mulf %0, %0 : vector<16x32xf32>
    %cst_1 = arith.constant dense<0.000000e+00> : vector<16xf32>
    %4 = vector.multi_reduction <add>, %3, %cst_1 [1] : vector<16x32xf32> to vector<16xf32>
    %5 = vector.shape_cast %4 : vector<16xf32> to vector<16x1xf32>
    %cst_2 = arith.constant 3.125000e-02 : f32
    %6 = vector.broadcast %cst_2 : f32 to vector<16x1xf32>
    %7 = arith.mulf %2, %6 : vector<16x1xf32>
    %8 = arith.mulf %2, %7 : vector<16x1xf32>
    %9 = arith.subf %5, %8 : vector<16x1xf32>
    %cst_3 = arith.constant 3.100000e+01 : f32
    %10 = vector.broadcast %cst_3 : f32 to vector<16x1xf32>
    %11 = arith.divf %9, %10 : vector<16x1xf32>
    %cst_4 = arith.constant 0.000000e+00 : f32
    %12 = vector.broadcast %cst_4 : f32 to vector<16x1xf32>
    %13 = arith.maximumf %11, %12 : vector<16x1xf32>
    %14 = math.sqrt %13 : vector<16x1xf32>
    %cst_5 = arith.constant 9.99999997E-7 : f32
    %15 = vector.broadcast %cst_5 : f32 to vector<16x1xf32>
    %16 = arith.addf %14, %15 : vector<16x1xf32>
    %17 = tpu.reciprocal %16 : vector<16x1xf32> -> vector<16x1xf32>
    %c0_6 = arith.constant 0 : index
    %18 = memref.load %arg1[%c0_6] : memref<1xf32, #tpu.memory_space<smem>>
    %19 = vector.broadcast %18 : f32 to vector<16x1xf32>
    %20 = arith.mulf %19, %17 : vector<16x1xf32>
    %21 = vector.broadcast %7 : vector<16x1xf32> to vector<16x32xf32>
    %22 = arith.subf %0, %21 : vector<16x32xf32>
    %23 = vector.broadcast %20 : vector<16x1xf32> to vector<16x32xf32>
    %24 = arith.mulf %23, %22 : vector<16x32xf32>
    %c0_7 = arith.constant 0 : index
    %25 = memref.load %arg2[%c0_7] : memref<1xf32, #tpu.memory_space<smem>>
    %26 = vector.broadcast %25 : f32 to vector<16x32xf32>
    %27 = arith.addf %24, %26 : vector<16x32xf32>
    %c0_8 = arith.constant 0 : index
    %c0_9 = arith.constant 0 : index
    %28 = vector.load %arg4[%c0_8, %c0_9] : memref<16x32xf32, #tpu.memory_space<vmem>>, vector<16x32xf32>
    tpu.vector_store %arg4[%c0_8, %c0_9], %27 {strides = array<i32>} : memref<16x32xf32, #tpu.memory_space<vmem>>, vector<16x32xf32>,
    return
  }
  func.func @transform_0(%arg0: i32) -> i32 {
    %c0_i32 = arith.constant 0 : i32
    %c0_i32_0 = arith.constant 0 : i32
    return %c0_i32 : i32
  }
  func.func @transform_1(%arg0: i32) -> i32 {
    %c0_i32 = arith.constant 0 : i32
    %c0_i32_0 = arith.constant 0 : i32
    return %c0_i32 : i32
  }
  func.func @transform_2(%arg0: i32) -> (i32, i32) {
    %c0_i32 = arith.constant 0 : i32
    %c0_i32_0 = arith.constant 0 : i32
    return %arg0, %c0_i32 : i32, i32
  }
  func.func @transform_3(%arg0: i32) -> (i32, i32) {
    %c0_i32 = arith.constant 0 : i32
    %c0_i32_0 = arith.constant 0 : i32
    return %arg0, %c0_i32 : i32, i32
  }
}

</mosaic_0001>

<llo_original>
// kernel: tpu_custom_call.1
$region0: #{tpu_custom_call.1}
  #allocation0 [shape = 'u32[]', space=smem, size = 0x4, offset = 0x4, fixed_abs, tag = 'smem constant byte address 0x4 - core index']
  #allocation1 [shape = 'u32[144,128]{1,0:T(1,128)}', space=vmem, size = 0x12000, scoped, tag = 'internal scratch']
  #allocation2 [shape = 'f32[1]{0:T(128)S(6)}', space=smem, size = 0x200, scoped, tag = 'scoped memory for tpu_custom_call.1']
  #allocation3 [shape = 'f32[1]{0:T(128)S(6)}', space=smem, size = 0x200, scoped, tag = 'scoped memory for tpu_custom_call.1']
  %s0 = inlined_call_operand.<no memory space> [shape: f32[1], index: 0, kind: input, shape index: {}]
  %s1 = inlined_call_operand.<no memory space> [shape: f32[1], index: 1, kind: input, shape index: {}]
  %s2 = inlined_call_operand.hbm [shape: f32[16,32], index: 2, kind: input, shape index: {}]
  %s3 = inlined_call_operand.hbm [shape: f32[16,32], index: 3, kind: output, shape index: {}]
  %s4 = sld [smem:[#allocation0]]
  $region26: #{tpu_custom_call.1} parent=0
    _
  %s6 = ssub.s32 1, %s4
  %s7 = scalar_select 0, %s6, %s4
  %8 = sst [smem:[#allocation2]] %s0
  %9 = sst [smem:[#allocation3]] %s1
  $region1: #{tpu_custom_call.1} parent=0
    #allocation4 [shape = 'u8[8192]{0}', space=vmem, size = 0x2000, scoped, tag = 'input window, operand 2, single buffered']
    #allocation5 [shape = 's32[1]{0}', space=sflag, size = 0x4, scoped, tag = 'scoped memory for tpu_custom_call.1']
    #allocation6 [shape = 's32[1]{0}', space=sflag, size = 0x4, scoped, tag = 'scoped memory for tpu_custom_call.1']
    #allocation7 [shape = 'u8[8192]{0}', space=vmem, size = 0x2000, scoped, tag = 'output window, operand 0, single buffered']
    %10 = vsyncpa [#allocation5], 0
    %11 = vsyncpa [#allocation6], 0
    // Predicated region
    $region2: #{tpu_custom_call.1} parent=1 // pred_check
      _
    $region3: #{tpu_custom_call.1} parent=1 // pred_check_branch
      %13 = sbr.rel (0) target = $region5
    $region4: #{tpu_custom_call.1} parent=1 // pred_region
      _
    $region5: #{tpu_custom_call.1} parent=1 // pred_fallthru
      _
    // Predicated region
    $region6: #{tpu_custom_call.1} parent=1 // pred_check
      _
    $region7: #{tpu_custom_call.1} parent=1 // pred_check_branch
      %15 = sbr.rel (0) target = $region9
    $region8: #{tpu_custom_call.1} parent=1 // pred_region
      _
    $region9: #{tpu_custom_call.1} parent=1 // pred_fallthru
      _
    // Predicated region
    $region10: #{tpu_custom_call.1} parent=1 // pred_check
      _
    $region11: #{tpu_custom_call.1} parent=1 // pred_check_branch
      %17 = sbr.rel (0) target = $region13
    $region12: #{tpu_custom_call.1} parent=1 // pred_region
      %s19 = ssub.s32 256, 256
      %20 = vsyncadd [#allocation5], %s19
      %s21 = sshll.u32 [#allocation4], 4
      %s22 = int_to_ptr.vmem [resolvable:$true] %s21
      %27 = dma.hbm_to_vmem [thread:$0]  %s2, 256, %s22, [#allocation5], 128, 128, 8
    $region13: #{tpu_custom_call.1} parent=1 // pred_fallthru
      _
    // Predicated region
    $region14: #{tpu_custom_call.1} parent=1 // pred_check
      _
    $region15: #{tpu_custom_call.1} parent=1 // pred_check_branch
      %29 = sbr.rel (0) target = $region17
    $region16: #{tpu_custom_call.1} parent=1 // pred_region
      %30 = dma.done [#allocation5], 256
    $region17: #{tpu_custom_call.1} parent=1 // pred_fallthru
      _
    %v31 = vld [vmem:[#allocation4] sm:$0xff]
    %v32 = vld [vmem:[#allocation4 + $0x8] sm:$0xff]
    %vm33 = vcmask 261120
    %v34 = vsel %vm33, %v31, 0.0
    %35 = vadd.xlane.f32.xlu0 %v34
    %v36 = vpop.xlane.xlu0 %35
    %v37 = vsel %vm33, %v32, 0.0
    %38 = vadd.xlane.f32.xlu0 %v37
    %v39 = vpop.xlane.xlu0 %38
    %v40 = vmul.f32 %v31, %v31
    %v41 = vmul.f32 %v32, %v32
    %v42 = vsel %vm33, %v40, 0.0
    %43 = vadd.xlane.f32.xlu0 %v42
    %v44 = vpop.xlane.xlu0 %43
    %v45 = vsel %vm33, %v41, 0.0
    %46 = vadd.xlane.f32.xlu0 %v45
    %v47 = vpop.xlane.xlu0 %46
    %v48 = vmul.f32 %v36, 0.03125
    %v49 = vmul.f32 %v39, 0.03125
    %v50 = vmul.f32 %v36, %v48
    %v51 = vmul.f32 %v39, %v49
    %v52 = vsub.f32 %v44, %v50
    %v53 = vsub.f32 %v47, %v51
    %v54 = vrcp.pop 31.0
    %v55 = vmul.f32 %v52, %v54
    %v56 = vmul.f32 %v53, %v54
    %v57 = vmax.f32 %v55, 0.0
    %v58 = vmax.f32 %v56, 0.0
    %v59 = vrsqrt.pop %v57
    %v60 = vmul.f32 %v57, %v59
    %vm61 = vcmp.eq.f32.partialorder %v57, inf
    %v62 = vsel %vm61, %v57, %v60
    %vm63 = vcmp.eq.f32.partialorder %v57, 0.0
    %v64 = vand.u32 %v57, 2147483648
    %v65 = vsel %vm63, %v64, %v62
    %v66 = vrsqrt.pop %v58
    %v67 = vmul.f32 %v58, %v66
    %vm68 = vcmp.eq.f32.partialorder %v58, inf
    %v69 = vsel %vm68, %v58, %v67
    %vm70 = vcmp.eq.f32.partialorder %v58, 0.0
    %v71 = vand.u32 %v58, 2147483648
    %v72 = vsel %vm70, %v71, %v69
    %v73 = vadd.f32 %v65, 1e-06
    %v74 = vadd.f32 %v72, 1e-06
    %v75 = vrcp.pop %v73
    %v76 = vrcp.pop %v74
    %s77 = sld [smem:[#allocation2]]
    %v78 = vstv %s77
    %v79 = vmul.f32 %v78, %v75
    %v80 = vmul.f32 %v78, %v76
    %v81 = vsub.f32 %v31, %v48
    %v82 = vsub.f32 %v32, %v49
    %v83 = vmul.f32 %v79, %v81
    %v84 = vmul.f32 %v80, %v82
    %s85 = sld [smem:[#allocation3]]
    %v86 = vstv %s85
    %v87 = vadd.f32 %v83, %v86
    %v88 = vadd.f32 %v84, %v86
    %89 = vst.msk [vmem:[#allocation7] sm:$0xff] %vm33, %v87
    %90 = vst.msk [vmem:[#allocation7 + $0x8] sm:$0xff] %vm33, %v88
    // Predicated region
    $region18: #{tpu_custom_call.1} parent=1 // pred_check
      _
    $region19: #{tpu_custom_call.1} parent=1 // pred_check_branch
      %92 = sbr.rel (0) target = $region21
    $region20: #{tpu_custom_call.1} parent=1 // pred_region
      %s94 = ssub.s32 256, 256
      %95 = vsyncadd [#allocation6], %s94
      %s96 = sshll.u32 [#allocation7], 4
      %s97 = int_to_ptr.vmem [resolvable:$true] %s96
      %102 = dma.vmem_to_hbm [thread:$0]  %s97, 256, %s3, [#allocation6], 128, 128, 8
    $region21: #{tpu_custom_call.1} parent=1 // pred_fallthru
      _
    // Predicated region
    $region22: #{tpu_custom_call.1} parent=1 // pred_check
      _
    $region23: #{tpu_custom_call.1} parent=1 // pred_check_branch
      %104 = sbr.rel (0) target = $region25
    $region24: #{tpu_custom_call.1} parent=1 // pred_region
      %105 = dma.done [#allocation6], 256
    $region25: #{tpu_custom_call.1} parent=1 // pred_fallthru
      _
    %106 = vsyncpa [#allocation5], 1
    %107 = vsyncpa [#allocation6], 1

</llo_original>
